<compile_context>
chip_gen: v6e
topology: v6e:2x2x1
jax: 0.10.0
libtpu: 0.0.40
codegen_flags: <defaults>
</compile_context>

<pallas_src>
import functools
import math

import jax
import jax.numpy as jnp
import numpy as np
from jax.experimental import pallas as pl
from jax.experimental.pallas import tpu as pltpu


def _psi_suffix_kernel(x_ref, w_ref, boff_ref, bdiag_ref, o_ref, *,
                       n_layers, c_max, cout_last, n, tile_p,
                       predict_diagonal):
    """Fused PsiSuffix forward on one (c_max, tile_p) spatial slab.

    x_ref:     (1, c_max, tile_p)   channel-padded input, lanes = spatial
    w_ref:     (L, c_max, Kc)       Kc = 2*c_max (off || diag) or c_max
    boff_ref:  (L, c_max, 1)
    bdiag_ref: (L, c_max, 1)
    o_ref:     (1, cout_last, tile_p)
    """
    act = x_ref[0].astype(jnp.float32)                       # (c_max, tile_p)

    if predict_diagonal:
        # Global flat spatial index of each lane.  For col = i*N + j (i,j < N)
        # the diagonal positions (i == j) are exactly the multiples of N+1.
        col = (pl.program_id(1) * tile_p
               + jax.lax.broadcasted_iota(jnp.int32, (1, tile_p), 1))
        mask = (col % (n + 1) == 0).astype(jnp.float32)       # (1, tile_p)

    for li in range(n_layers):
        w = w_ref[li]                                         # (c_max, Kc)
        if predict_diagonal:
            # One dot covers both the off-diag and diag 1x1 convs.
            aug = jnp.concatenate([act, act * mask], axis=0)  # (2*c_max, tp)
        else:
            aug = act
        y = jnp.dot(w, aug, preferred_element_type=jnp.float32)
        y = y + boff_ref[li]                                  # (c_max, 1) bcast
        if predict_diagonal:
            y = y + bdiag_ref[li] * mask
        if li < n_layers - 1:                                 # ReLU between layers
            y = jnp.maximum(y, 0.0)
        act = y

    o_ref[0] = act[:cout_last, :].astype(o_ref.dtype)


def _choose_tile_p(p_total):
    for cand in (2048, 1024, 512, 256, 128):
        if p_total % cand == 0:
            return cand
    return p_total  # full extent is always a legal block


def psi_suffix_forward(x_nchw, params, predict_diagonal=True):
    """x_nchw: (B, C, N, N) float32.  Returns (B, features[-1], N, N)."""
    B, C, N, _ = x_nchw.shape
    P = N * N
    L = len(params)
    couts = [p[0].shape[0] for p in params]
    cout_last = couts[-1]
    c_max = max(8, -(-max([C] + couts) // 8) * 8)   # pad channels to mult of 8
    Kc = 2 * c_max if predict_diagonal else c_max

    # Pack & zero-pad all layer weights/biases into resident stacked arrays.
    w_all = np.zeros((L, c_max, Kc), np.float32)
    boff_all = np.zeros((L, c_max, 1), np.float32)
    bdiag_all = np.zeros((L, c_max, 1), np.float32)
    for li, (w_off, b_off, w_dia, b_dia) in enumerate(params):
        co, ci = w_off.shape
        w_all[li, :co, :ci] = np.asarray(w_off)
        boff_all[li, :co, 0] = np.asarray(b_off)
        if predict_diagonal:
            w_all[li, :co, c_max:c_max + ci] = np.asarray(w_dia)
            bdiag_all[li, :co, 0] = np.asarray(b_dia)
    w_all = jnp.asarray(w_all)
    boff_all = jnp.asarray(boff_all)
    bdiag_all = jnp.asarray(bdiag_all)

    # NCHW -> (B, C, N*N) slab (free reshape, no transpose); pad channels.
    x_slab = x_nchw.reshape(B, C, P)
    if c_max > C:
        x_slab = jnp.pad(x_slab, ((0, 0), (0, c_max - C), (0, 0)))

    tile_p = _choose_tile_p(P)
    grid = (B, P // tile_p)

    kernel = functools.partial(
        _psi_suffix_kernel, n_layers=L, c_max=c_max, cout_last=cout_last,
        n=N, tile_p=tile_p, predict_diagonal=predict_diagonal)

    y = pl.pallas_call(
        kernel,
        out_shape=jax.ShapeDtypeStruct((B, cout_last, P), jnp.float32),
        grid_spec=pltpu.PrefetchScalarGridSpec(
            num_scalar_prefetch=0,
            grid=grid,
            in_specs=[
                pl.BlockSpec((1, c_max, tile_p), lambda b, p: (b, 0, p)),
                pl.BlockSpec((L, c_max, Kc), lambda b, p: (0, 0, 0)),
                pl.BlockSpec((L, c_max, 1), lambda b, p: (0, 0, 0)),
                pl.BlockSpec((L, c_max, 1), lambda b, p: (0, 0, 0)),
            ],
            out_specs=pl.BlockSpec((1, cout_last, tile_p),
                                   lambda b, p: (b, 0, p)),
        ),
        compiler_params=pltpu.CompilerParams(
            dimension_semantics=("parallel", "parallel")),
    )(x_slab, w_all, boff_all, bdiag_all)

    return y.reshape(B, cout_last, N, N)


def init_params(features, key):
    """Deterministic params for each DiagOffdiagMLP (conv2d + conv1d, 1x1)."""
    params = []
    for i in range(len(features) - 1):
        cin, cout = features[i], features[i + 1]
        key, k1, k2, k3, k4 = jax.random.split(key, 5)
        bound = 1.0 / math.sqrt(cin)  # PyTorch conv default-init bound
        w_off = jax.random.uniform(k1, (cout, cin), jnp.float32, -bound, bound)
        b_off = jax.random.uniform(k2, (cout,), jnp.float32, -bound, bound)
        w_dia = jax.random.uniform(k3, (cout, cin), jnp.float32, -bound, bound)
        b_dia = jax.random.uniform(k4, (cout,), jnp.float32, -bound, bound)
        params.append((w_off, b_off, w_dia, b_dia))
    return params


def psi_suffix_reference(x_nchw, params, predict_diagonal=True):
    """Pure-JAX reference mirroring the PyTorch semantics."""
    x = x_nchw
    n_layers = len(params)
    for li, (w_off, b_off, w_dia, b_dia) in enumerate(params):
        off = jnp.einsum('bcij,oc->boij', x, w_off) + b_off[None, :, None, None]
        if predict_diagonal:
            diag_x = jnp.einsum('bcii->bci', x)
            dia = jnp.einsum('bci,oc->boi', diag_x, w_dia) + b_dia[None, :, None]
            N = x.shape[-1]
            off = off + dia[..., None] * jnp.eye(N, dtype=x.dtype)
        x = off
        if li < n_layers - 1:
            x = jax.nn.relu(x)
    return x


if __name__ == "__main__":
    key = jax.random.PRNGKey(0)
    B, N = 2, 16
    features = [4, 32, 8]          # PsiSuffix(features, predict_diagonal=True)

    kx, kp = jax.random.split(key)
    x = jax.random.normal(kx, (B, features[0], N, N), jnp.float32)
    params = init_params(features, kp)

    # predict_diagonal=True path
    y = psi_suffix_forward(x, params, predict_diagonal=True)
    y = jax.block_until_ready(y)
    y_ref = psi_suffix_reference(x, params, predict_diagonal=True)
    assert y.shape == (B, features[-1], N, N)
    assert np.allclose(np.asarray(y), np.asarray(y_ref), atol=1e-4, rtol=1e-4)

    # predict_diagonal=False path (statically specialized: no diag matmul)
    y2 = psi_suffix_forward(x, params, predict_diagonal=False)
    y2 = jax.block_until_ready(y2)
    y2_ref = psi_suffix_reference(x, params, predict_diagonal=False)
    assert np.allclose(np.asarray(y2), np.asarray(y2_ref), atol=1e-4, rtol=1e-4)

    print("KERNEL_OK")
</pallas_src>

<mosaic_0001>
module attributes {stable_mosaic.version = 11 : i64} {
  func.func @_psi_suffix_kernel(%arg0: i32, %arg1: i32, %arg2: memref<1x32x256xf32, #tpu.memory_space<vmem>>, %arg3: memref<2x32x64xf32, #tpu.memory_space<vmem>>, %arg4: memref<2x32x1xf32, #tpu.memory_space<vmem>>, %arg5: memref<2x32x1xf32, #tpu.memory_space<vmem>>, %arg6: memref<1x8x256xf32, #tpu.memory_space<vmem>>) attributes {dimension_semantics = [#tpu.dimension_semantics<parallel>, #tpu.dimension_semantics<parallel>], iteration_bounds = array<i64: 2, 1>, scalar_prefetch = 0 : i64, scratch_operands = 0 : i64, tpu.core_type = #tpu.core_type<tc>, window_params = [{transform_indices = @transform_0, window_bounds = array<i64: 1, 32, 256>}, {pipeline_mode = #tpu.pipeline_mode<synchronous>, transform_indices = @transform_1, window_bounds = array<i64: 2, 32, 64>}, {pipeline_mode = #tpu.pipeline_mode<synchronous>, transform_indices = @transform_2, window_bounds = array<i64: 2, 32, 1>}, {pipeline_mode = #tpu.pipeline_mode<synchronous>, transform_indices = @transform_3, window_bounds = array<i64: 2, 32, 1>}, {transform_indices = @transform_4, window_bounds = array<i64: 1, 8, 256>}]} {
    %c0 = arith.constant 0 : index
    %c0_0 = arith.constant 0 : index
    %c0_1 = arith.constant 0 : index
    %0 = vector.load %arg2[%c0, %c0_0, %c0_1] : memref<1x32x256xf32, #tpu.memory_space<vmem>>, vector<1x32x256xf32>
    %1 = vector.shape_cast %0 : vector<1x32x256xf32> to vector<32x256xf32>
    %c256_i32 = arith.constant 256 : i32
    %2 = arith.muli %arg1, %c256_i32 : i32
    %3 = tpu.iota {dimensions = array<i32: 1>} : vector<1x256xi32>
    %4 = vector.broadcast %2 : i32 to vector<1x256xi32>
    %5 = arith.addi %4, %3 : vector<1x256xi32>
    %c17_i32 = arith.constant 17 : i32
    %c0_i32 = arith.constant 0 : i32
    %6 = arith.cmpi eq, %c17_i32, %c0_i32 : i32
    %c1_i32 = arith.constant 1 : i32
    %7 = arith.select %6, %c1_i32, %c17_i32 : i32
    %8 = vector.broadcast %7 : i32 to vector<1x256xi32>
    %9 = arith.remsi %5, %8 : vector<1x256xi32>
    %c0_i32_2 = arith.constant 0 : i32
    %10 = vector.broadcast %c0_i32_2 : i32 to vector<1x256xi32>
    %11 = arith.cmpi ne, %9, %10 : vector<1x256xi32>
    %c0_i32_3 = arith.constant 0 : i32
    %12 = vector.broadcast %c0_i32_3 : i32 to vector<1x256xi32>
    %13 = arith.cmpi slt, %9, %12 : vector<1x256xi32>
    %c0_i32_4 = arith.constant 0 : i32
    %14 = arith.cmpi slt, %7, %c0_i32_4 : i32
    %15 = vector.broadcast %14 : i1 to vector<1x256xi1>
    %16 = vector.broadcast %15 : vector<1x256xi1> to vector<1x256xi1>
    %17 = arith.xori %13, %16 : vector<1x256xi1>
    %18 = arith.andi %17, %11 : vector<1x256xi1>
    %19 = vector.broadcast %7 : i32 to vector<1x256xi32>
    %20 = arith.addi %9, %19 : vector<1x256xi32>
    %21 = arith.select %18, %20, %9 : vector<1x256xi1>, vector<1x256xi32>
    %c0_i32_5 = arith.constant 0 : i32
    %22 = vector.broadcast %c0_i32_5 : i32 to vector<1x256xi32>
    %23 = arith.cmpi eq, %21, %22 : vector<1x256xi32>
    %24 = arith.extui %23 : vector<1x256xi1> to vector<1x256xi32>
    %25 = arith.sitofp %24 : vector<1x256xi32> to vector<1x256xf32>
    %c0_6 = arith.constant 0 : index
    %c0_7 = arith.constant 0 : index
    %c0_8 = arith.constant 0 : index
    %26 = vector.load %arg3[%c0_6, %c0_7, %c0_8] : memref<2x32x64xf32, #tpu.memory_space<vmem>>, vector<1x32x64xf32>
    %27 = vector.shape_cast %26 : vector<1x32x64xf32> to vector<32x64xf32>
    %28 = vector.broadcast %25 : vector<1x256xf32> to vector<32x256xf32>
    %29 = arith.mulf %1, %28 : vector<32x256xf32>
    %30 = tpu.concatenate %1, %29 in 0 : vector<32x256xf32>, vector<32x256xf32> -> vector<64x256xf32>
    %cst = arith.constant dense<0.000000e+00> : vector<32x256xf32>
    %31 = tpu.matmul %27, %30, %cst {dimension_numbers = #tpu.dot_dimension_numbers<[1], [0], [0], [1], [0, 0, 1, 1], [], []>} : vector<32x64xf32>, vector<64x256xf32>, vector<32x256xf32> -> vector<32x256xf32>
    %c0_9 = arith.constant 0 : index
    %c0_10 = arith.constant 0 : index
    %c0_11 = arith.constant 0 : index
    %32 = vector.load %arg4[%c0_9, %c0_10, %c0_11] : memref<2x32x1xf32, #tpu.memory_space<vmem>>, vector<1x32x1xf32>
    %33 = vector.shape_cast %32 : vector<1x32x1xf32> to vector<32x1xf32>
    %34 = vector.broadcast %33 : vector<32x1xf32> to vector<32x256xf32>
    %35 = arith.addf %31, %34 : vector<32x256xf32>
    %c0_12 = arith.constant 0 : index
    %c0_13 = arith.constant 0 : index
    %c0_14 = arith.constant 0 : index
    %36 = vector.load %arg5[%c0_12, %c0_13, %c0_14] : memref<2x32x1xf32, #tpu.memory_space<vmem>>, vector<1x32x1xf32>
    %37 = vector.shape_cast %36 : vector<1x32x1xf32> to vector<32x1xf32>
    %38 = vector.broadcast %37 : vector<32x1xf32> to vector<32x256xf32>
    %39 = vector.broadcast %25 : vector<1x256xf32> to vector<32x256xf32>
    %40 = arith.mulf %38, %39 : vector<32x256xf32>
    %41 = arith.addf %35, %40 : vector<32x256xf32>
    %cst_15 = arith.constant 0.000000e+00 : f32
    %42 = vector.broadcast %cst_15 : f32 to vector<32x256xf32>
    %43 = arith.maximumf %41, %42 : vector<32x256xf32>
    %c1 = arith.constant 1 : index
    %c0_16 = arith.constant 0 : index
    %c0_17 = arith.constant 0 : index
    %44 = vector.load %arg3[%c1, %c0_16, %c0_17] : memref<2x32x64xf32, #tpu.memory_space<vmem>>, vector<1x32x64xf32>
    %45 = vector.shape_cast %44 : vector<1x32x64xf32> to vector<32x64xf32>
    %46 = vector.broadcast %25 : vector<1x256xf32> to vector<32x256xf32>
    %47 = arith.mulf %43, %46 : vector<32x256xf32>
    %48 = tpu.concatenate %43, %47 in 0 : vector<32x256xf32>, vector<32x256xf32> -> vector<64x256xf32>
    %cst_18 = arith.constant dense<0.000000e+00> : vector<32x256xf32>
    %49 = tpu.matmul %45, %48, %cst_18 {dimension_numbers = #tpu.dot_dimension_numbers<[1], [0], [0], [1], [0, 0, 1, 1], [], []>} : vector<32x64xf32>, vector<64x256xf32>, vector<32x256xf32> -> vector<32x256xf32>
    %c1_19 = arith.constant 1 : index
    %c0_20 = arith.constant 0 : index
    %c0_21 = arith.constant 0 : index
    %50 = vector.load %arg4[%c1_19, %c0_20, %c0_21] : memref<2x32x1xf32, #tpu.memory_space<vmem>>, vector<1x32x1xf32>
    %51 = vector.shape_cast %50 : vector<1x32x1xf32> to vector<32x1xf32>
    %52 = vector.broadcast %51 : vector<32x1xf32> to vector<32x256xf32>
    %53 = arith.addf %49, %52 : vector<32x256xf32>
    %c1_22 = arith.constant 1 : index
    %c0_23 = arith.constant 0 : index
    %c0_24 = arith.constant 0 : index
    %54 = vector.load %arg5[%c1_22, %c0_23, %c0_24] : memref<2x32x1xf32, #tpu.memory_space<vmem>>, vector<1x32x1xf32>
    %55 = vector.shape_cast %54 : vector<1x32x1xf32> to vector<32x1xf32>
    %56 = vector.broadcast %55 : vector<32x1xf32> to vector<32x256xf32>
    %57 = vector.broadcast %25 : vector<1x256xf32> to vector<32x256xf32>
    %58 = arith.mulf %56, %57 : vector<32x256xf32>
    %59 = arith.addf %53, %58 : vector<32x256xf32>
    %60 = vector.extract_strided_slice %59 {offsets = [0, 0], sizes = [8, 256], strides = [1, 1]} : vector<32x256xf32> to vector<8x256xf32>
    %c0_25 = arith.constant 0 : index
    %c0_26 = arith.constant 0 : index
    %c0_27 = arith.constant 0 : index
    %61 = vector.load %arg6[%c0_25, %c0_26, %c0_27] : memref<1x8x256xf32, #tpu.memory_space<vmem>>, vector<1x8x256xf32>
    %62 = vector.shape_cast %61 : vector<1x8x256xf32> to vector<8x256xf32>
    %63 = vector.shape_cast %60 : vector<8x256xf32> to vector<1x8x256xf32>
    tpu.vector_store %arg6[%c0_25, %c0_26, %c0_27], %63 {strides = array<i32>} : memref<1x8x256xf32, #tpu.memory_space<vmem>>, vector<1x8x256xf32>,
    return
  }
  func.func @transform_0(%arg0: i32, %arg1: i32) -> (i32, i32, i32) {
    %c0_i32 = arith.constant 0 : i32
    %c0_i32_0 = arith.constant 0 : i32
    return %arg0, %c0_i32, %arg1 : i32, i32, i32
  }
  func.func @transform_1(%arg0: i32, %arg1: i32) -> (i32, i32, i32) {
    %c0_i32 = arith.constant 0 : i32
    %c0_i32_0 = arith.constant 0 : i32
    %c0_i32_1 = arith.constant 0 : i32
    %c0_i32_2 = arith.constant 0 : i32
    return %c0_i32, %c0_i32_0, %c0_i32_1 : i32, i32, i32
  }
  func.func @transform_2(%arg0: i32, %arg1: i32) -> (i32, i32, i32) {
    %c0_i32 = arith.constant 0 : i32
    %c0_i32_0 = arith.constant 0 : i32
    %c0_i32_1 = arith.constant 0 : i32
    %c0_i32_2 = arith.constant 0 : i32
    return %c0_i32, %c0_i32_0, %c0_i32_1 : i32, i32, i32
  }
  func.func @transform_3(%arg0: i32, %arg1: i32) -> (i32, i32, i32) {
    %c0_i32 = arith.constant 0 : i32
    %c0_i32_0 = arith.constant 0 : i32
    %c0_i32_1 = arith.constant 0 : i32
    %c0_i32_2 = arith.constant 0 : i32
    return %c0_i32, %c0_i32_0, %c0_i32_1 : i32, i32, i32
  }
  func.func @transform_4(%arg0: i32, %arg1: i32) -> (i32, i32, i32) {
    %c0_i32 = arith.constant 0 : i32
    %c0_i32_0 = arith.constant 0 : i32
    return %arg0, %c0_i32, %arg1 : i32, i32, i32
  }
}

</mosaic_0001>

<llo_original>
// kernel: tpu_custom_call.1
$region0: #{tpu_custom_call.1}
  #allocation0 [shape = 'u32[]', space=smem, size = 0x4, offset = 0x4, fixed_abs, tag = 'smem constant byte address 0x4 - core index']
  #allocation1 [shape = 'u32[144,128]{1,0:T(1,128)}', space=vmem, size = 0x12000, scoped, tag = 'internal scratch']
  %s0 = inlined_call_operand.vmem [shape: f32[2,32,256], index: 0, kind: input, shape index: {}]
  %s1 = inlined_call_operand.hbm [shape: f32[2,32,64], index: 1, kind: input, shape index: {}]
  %s2 = inlined_call_operand.vmem [shape: f32[2,32,1], index: 2, kind: input, shape index: {}]
  %s3 = inlined_call_operand.vmem [shape: f32[2,32,1], index: 3, kind: input, shape index: {}]
  %s4 = inlined_call_operand.hbm [shape: f32[2,8,256], index: 4, kind: output, shape index: {}]
  %s5 = sld [smem:[#allocation0]]
  $region53: #{tpu_custom_call.1} parent=0
    _
  %s7 = ssub.s32 1, %s5
  %s8 = scalar_select 0, %s7, %s5
  $region1: #{tpu_custom_call.1} parent=0
    #allocation2 [shape = 'u8[32768]{0}', space=vmem, size = 0x8000, scoped, tag = 'input window, operand 1, single buffered']
    #allocation3 [shape = 's32[2]{0}', space=sflag, size = 0x8, scoped, tag = 'scoped memory for tpu_custom_call.1']
    #allocation4 [shape = 's32[2]{0}', space=sflag, size = 0x8, scoped, tag = 'scoped memory for tpu_custom_call.1']
    #allocation5 [shape = 'u8[16384]{0}', space=vmem, size = 0x4000, scoped, tag = 'output window, operand 0']
    %9 = vsyncpa [#allocation3], 0
    %10 = vsyncpa [#allocation4], 0
    %s11 = scalar_lea.sflag [#allocation4], 1
    %12 = vsyncpa %s11, 0
    loop: start=0, step=1, limit=4
    $region2: #{tpu_custom_call.1} parent=1 // loop_pre_header
      _
    $region3: #{tpu_custom_call.1} parent=1 // loop_header
      %s14 = sphi 0, %s18
      %p15 = scmp.ge.s32.totalorder %s14, 4
      %s21 = sphi 0, %s33
      %s22 = sphi 0, %s29
      %s23 = sphi 0, %s21
      %s24 = sphi 0, %s22
      %s25 = sphi 0, %s23
      %s26 = sphi 0, %s24
      %s38 = sphi 0, %s40
      %s41 = sphi 0, %s38
      %s42 = sphi 0, %s41
      %s58 = sphi 0, %s42
      %s62 = sphi 0, %s62
      %s64 = sphi 0, %s62
      %s65 = sphi 0, %s64
      %s79 = sphi 0, %s65
      %s83 = sphi 0, %s83
      %s85 = sphi 0, %s83
      %s86 = sphi 0, %s85
      %s100 = sphi 0, %s86
      %s104 = sphi 0, %s104
      %s106 = sphi 0, %s104
      %s107 = sphi 0, %s106
      %s121 = sphi 0, %s107
      %s129 = sphi 0, %s131
      %s132 = sphi 0, %s129
      %s133 = sphi 0, %s132
      %s149 = sphi 0, %s133
    $region4: #{tpu_custom_call.1} parent=1 // loop_header_branch
      %17 = sbr.rel (%p15) target = $region8
    $region5: #{tpu_custom_call.1} parent=1 // loop_body
      %s19 = ssub.s32 %s14, 1
      %s20 = ssub.s32 %s14, 2
      %s27 = sadd.s32 1, %s22
      %p28 = scmp.ge.s32.totalorder %s27, 1
      %s29 = scalar_select %p28, 0, %s27
      %s30 = sadd.s32 1, %s21
      %s31 = scalar_select %p28, %s30, %s21
      %p32 = scmp.ge.s32.totalorder %s31, 2
      %s33 = scalar_select %p32, 0, %s31
      %s34 = ssub.s32 %s21, %s33
      %s35 = ssub.s32 %s22, %s29
      %s36 = sor.u32 %s34, %s35
      %p37 = scmp.eq.s32.totalorder %s36, 0
      %s39 = sadd.s32 %s38, 1
      %s40 = scalar_select %p37, %s38, %s39
      %p43 = pneg %p37
      %p44 = scmp.eq.s32.totalorder %s14, 1
      %p45 = por %p43, %p44
      %p46 = scmp.ne.s32.totalorder %s38, %s41
      %p47 = scmp.eq.s32.totalorder %s14, 0
      %p48 = por %p46, %p47
      %p49 = scmp.ne.s32.totalorder %s38, %s41
      %p50 = scmp.eq.s32.totalorder %s19, 1
      %p51 = por %p49, %p50
      %p52 = scmp.ne.s32.totalorder %s41, %s42
      %p53 = scmp.eq.s32.totalorder %s19, 0
      %p54 = por %p52, %p53
      %p55 = scmp.ne.s32.totalorder %s41, %s42
      %p56 = scmp.eq.s32.totalorder %s20, 1
      %p57 = por %p55, %p56
      %p59 = scmp.ne.s32.totalorder %s42, %s58
      %p60 = scmp.eq.s32.totalorder %s20, 0
      %p61 = por %p59, %p60
      %s63 = sadd.s32 %s62, 1
      %p66 = scmp.eq.s32.totalorder %s14, 1
      %p67 = scmp.ne.s32.totalorder %s62, %s64
      %p68 = scmp.eq.s32.totalorder %s14, 0
      %p69 = por %p67, %p68
      %p70 = scmp.ne.s32.totalorder %s62, %s64
      %p71 = scmp.eq.s32.totalorder %s19, 1
      %p72 = por %p70, %p71
      %p73 = scmp.ne.s32.totalorder %s64, %s65
      %p74 = scmp.eq.s32.totalorder %s19, 0
      %p75 = por %p73, %p74
      %p76 = scmp.ne.s32.totalorder %s64, %s65
      %p77 = scmp.eq.s32.totalorder %s20, 1
      %p78 = por %p76, %p77
      %p80 = scmp.ne.s32.totalorder %s65, %s79
      %p81 = scmp.eq.s32.totalorder %s20, 0
      %p82 = por %p80, %p81
      %s84 = sadd.s32 %s83, 1
      %p87 = scmp.eq.s32.totalorder %s14, 1
      %p88 = scmp.ne.s32.totalorder %s83, %s85
      %p89 = scmp.eq.s32.totalorder %s14, 0
      %p90 = por %p88, %p89
      %p91 = scmp.ne.s32.totalorder %s83, %s85
      %p92 = scmp.eq.s32.totalorder %s19, 1
      %p93 = por %p91, %p92
      %p94 = scmp.ne.s32.totalorder %s85, %s86
      %p95 = scmp.eq.s32.totalorder %s19, 0
      %p96 = por %p94, %p95
      %p97 = scmp.ne.s32.totalorder %s85, %s86
      %p98 = scmp.eq.s32.totalorder %s20, 1
      %p99 = por %p97, %p98
      %p101 = scmp.ne.s32.totalorder %s86, %s100
      %p102 = scmp.eq.s32.totalorder %s20, 0
      %p103 = por %p101, %p102
      %s105 = sadd.s32 %s104, 1
      %p108 = scmp.eq.s32.totalorder %s14, 1
      %p109 = scmp.ne.s32.totalorder %s104, %s106
      %p110 = scmp.eq.s32.totalorder %s14, 0
      %p111 = por %p109, %p110
      %p112 = scmp.ne.s32.totalorder %s104, %s106
      %p113 = scmp.eq.s32.totalorder %s19, 1
      %p114 = por %p112, %p113
      %p115 = scmp.ne.s32.totalorder %s106, %s107
      %p116 = scmp.eq.s32.totalorder %s19, 0
      %p117 = por %p115, %p116
      %p118 = scmp.ne.s32.totalorder %s106, %s107
      %p119 = scmp.eq.s32.totalorder %s20, 1
      %p120 = por %p118, %p119
      %p122 = scmp.ne.s32.totalorder %s107, %s121
      %p123 = scmp.eq.s32.totalorder %s20, 0
      %p124 = por %p122, %p123
      %s125 = ssub.s32 %s21, %s33
      %s126 = ssub.s32 %s22, %s29
      %s127 = sor.u32 %s125, %s126
      %p128 = scmp.eq.s32.totalorder %s127, 0
      %s130 = sadd.s32 %s129, 1
      %s131 = scalar_select %p128, %s129, %s130
      %p134 = pneg %p128
      %p135 = scmp.eq.s32.totalorder %s14, 1
      %p136 = por %p134, %p135
      %p137 = scmp.ne.s32.totalorder %s129, %s132
      %p138 = scmp.eq.s32.totalorder %s14, 0
      %p139 = por %p137, %p138
      %p140 = scmp.ne.s32.totalorder %s129, %s132
      %p141 = scmp.eq.s32.totalorder %s19, 1
      %p142 = por %p140, %p141
      %p143 = scmp.ne.s32.totalorder %s132, %s133
      %p144 = scmp.eq.s32.totalorder %s19, 0
      %p145 = por %p143, %p144
      %p146 = scmp.ne.s32.totalorder %s132, %s133
      %p147 = scmp.eq.s32.totalorder %s20, 1
      %p148 = por %p146, %p147
      %p150 = scmp.ne.s32.totalorder %s133, %s149
      %p151 = scmp.eq.s32.totalorder %s20, 0
      %p152 = por %p150, %p151
      %p153 = scmp.le.s32.totalorder 1, %s14
      %p154 = scmp.lt.s32.totalorder %s14, 3
      %p155 = pnand %p153, %p154
      %p156 = pneg %p155
      // Predicated region
      $region9: #{tpu_custom_call.1} parent=5 // pred_check
        _
      $region10: #{tpu_custom_call.1} parent=5 // pred_check_branch
        %158 = sbr.rel (%p155) target = $region12
      $region11: #{tpu_custom_call.1} parent=5 // pred_region
        %s159 = ssub.s32 %s14, 1
        // Predicated region
        $region13: #{tpu_custom_call.1} parent=11 // pred_check
          %p160 = pneg %p75
        $region14: #{tpu_custom_call.1} parent=11 // pred_check_branch
          %162 = sbr.rel (%p160) target = $region16
        $region15: #{tpu_custom_call.1} parent=11 // pred_region
          %s164 = ssub.s32 1024, 1024
          %165 = vsyncadd [#allocation3], %s164
          %s166 = sshll.u32 [#allocation2], 4
          %s167 = int_to_ptr.vmem [resolvable:$true] %s166
          %172 = dma.hbm_to_vmem [thread:$0]  %s1, 1024, %s167, [#allocation3], 128, 128, 8
        $region16: #{tpu_custom_call.1} parent=11 // pred_fallthru
          _
        // Predicated region
        $region17: #{tpu_custom_call.1} parent=11 // pred_check
          %p173 = pneg %p96
        $region18: #{tpu_custom_call.1} parent=11 // pred_check_branch
          %175 = sbr.rel (%p173) target = $region20
        $region19: #{tpu_custom_call.1} parent=11 // pred_region
          _
        $region20: #{tpu_custom_call.1} parent=11 // pred_fallthru
          _
        // Predicated region
        $region21: #{tpu_custom_call.1} parent=11 // pred_check
          %p176 = pneg %p117
        $region22: #{tpu_custom_call.1} parent=11 // pred_check_branch
          %178 = sbr.rel (%p176) target = $region24
        $region23: #{tpu_custom_call.1} parent=11 // pred_region
          _
        $region24: #{tpu_custom_call.1} parent=11 // pred_fallthru
          _
      $region12: #{tpu_custom_call.1} parent=5 // pred_fallthru
        _
      %p179 = scmp.lt.s32.totalorder %s14, 2
      // Predicated region
      $region25: #{tpu_custom_call.1} parent=5 // pred_check
        %p180 = pneg %p179
      $region26: #{tpu_custom_call.1} parent=5 // pred_check_branch
        %182 = sbr.rel (%p180) target = $region28
      $region27: #{tpu_custom_call.1} parent=5 // pred_region
        // Predicated region
        $region29: #{tpu_custom_call.1} parent=27 // pred_check
          %p183 = pneg %p48
        $region30: #{tpu_custom_call.1} parent=27 // pred_check_branch
          %185 = sbr.rel (%p183) target = $region32
        $region31: #{tpu_custom_call.1} parent=27 // pred_region
          %s186 = smul.u32 2, %s22
          %p187 = scmp.lt.s32.totalorder %s21, 1
          %s188 = scalar_select %p187, %s21, 1
          %p189 = scmp.lt.s32.totalorder %s186, 1
          %s190 = scalar_select %p189, %s186, 1
          %s191 = smul.addr %s188, 8
          %s192 = sadd.s32 %s190, %s191
          %s193 = smul.addr %s192, 8
          %s194 = scalar_lea.vmem %s0, %s193
          %s195 = smul.u32 2, %s22
        $region32: #{tpu_custom_call.1} parent=27 // pred_fallthru
          _
      $region28: #{tpu_custom_call.1} parent=5 // pred_fallthru
        _
      %p196 = scmp.le.s32.totalorder 1, %s14
      %p197 = scmp.lt.s32.totalorder %s14, 3
      %p198 = pnand %p196, %p197
      %p199 = pneg %p198
      // Predicated region
      $region33: #{tpu_custom_call.1} parent=5 // pred_check
        _
      $region34: #{tpu_custom_call.1} parent=5 // pred_check_branch
        %201 = sbr.rel (%p198) target = $region36
      $region35: #{tpu_custom_call.1} parent=5 // pred_region
        %s202 = ssub.s32 %s14, 1
        // Predicated region
        $region37: #{tpu_custom_call.1} parent=35 // pred_check
          %p203 = pneg %p75
        $region38: #{tpu_custom_call.1} parent=35 // pred_check_branch
          %205 = sbr.rel (%p203) target = $region40
        $region39: #{tpu_custom_call.1} parent=35 // pred_region
          %206 = dma.done [#allocation3], 1024
        $region40: #{tpu_custom_call.1} parent=35 // pred_fallthru
          _
        %s207 = smul.u32 2, %s24
        %p208 = scmp.lt.s32.totalorder %s23, 1
        %s209 = scalar_select %p208, %s23, 1
        %p210 = scmp.lt.s32.totalorder %s207, 1
        %s211 = scalar_select %p210, %s207, 1
        %s212 = smul.addr %s209, 8
        %s213 = sadd.s32 %s211, %s212
        %s214 = smul.addr %s213, 8
        %s215 = scalar_lea.vmem %s0, %s214
        %p216 = pneg %p54
        %p217 = pneg %p51
        %p218 = pneg %p75
        %p219 = pneg %p72
        %p220 = pneg %p96
        %p221 = pneg %p93
        %p222 = pneg %p117
        %p223 = pneg %p114
        %p224 = pneg %p145
        %p225 = pneg %p142
        %s226 = sand.u32 %s132, 1
        %s227 = scalar_lea.sflag [#allocation4], %s226
        %s228 = sand.u32 %s132, 1
        %s229 = smul.addr %s228, 16
        %s230 = scalar_lea.vmem [#allocation5], %s229
        %s231 = smul.u32 2, %s24
        %p232 = scmp.lt.s32.totalorder %s23, 1
        %s233 = scalar_select %p232, %s23, 1
        %p234 = scmp.lt.s32.totalorder %s231, 1
        %s235 = scalar_select %p234, %s231, 1
        %s236 = smul.addr %s233, 8
        %s237 = sadd.s32 %s235, %s236
        %s238 = smul.addr %s237, 8
        %s239 = scalar_lea.vmem %s0, %s238
        %s240 = smul.u32 2, %s24
        %s241 = smul.u32 2, %s24
        %v242 = vld [vmem:[%s239] sm:$0xff]
        %v243 = vld [vmem:[%s239 + $0x8] sm:$0xff]
        %v244 = vld [vmem:[%s239 + $0x10] sm:$0xff]
        %v245 = vld [vmem:[%s239 + $0x18] sm:$0xff]
        %v246 = vld [vmem:[%s239 + $0x20] sm:$0xff]
        %v247 = vld [vmem:[%s239 + $0x28] sm:$0xff]
        %v248 = vld [vmem:[%s239 + $0x30] sm:$0xff]
        %v249 = vld [vmem:[%s239 + $0x38] sm:$0xff]
        %s250 = smul.u32 %s24, 256
        %v251 = vlaneseq
        %v252 = vand.u32 %v251, 127
        %v253 = vadd.s32 %v252, 128
        %v254 = vstv %s250
        %v255 = vadd.s32 %v254, %v252
        %v256 = vadd.s32 %v254, %v253
        %vm257 = vcmp.lt.s32.totalorder %v255, 0
        %v258 = vsub.s32 0, %v255
        %v259 = vsel %vm257, %v258, %v255
        %v260 = vmul.u32.u64.compose %v259, 4042322161
        %v261 = vextract.low.u32 %v260
        %v262 = vextract.high.u32 %v260
        %v263 = vshrl.u32 %v262, 4
        %v264 = vmul.u32 %v263, 17
        %v265 = vsub.s32 %v259, %v264
        %v266 = vsub.s32 0, %v265
        %v267 = vsel %vm257, %v266, %v265
        %vm268 = vcmp.lt.s32.totalorder %v256, 0
        %v269 = vsub.s32 0, %v256
        %v270 = vsel %vm268, %v269, %v256
        %v271 = vmul.u32.u64.compose %v270, 4042322161
        %v272 = vextract.low.u32 %v271
        %v273 = vextract.high.u32 %v271
        %v274 = vshrl.u32 %v273, 4
        %v275 = vmul.u32 %v274, 17
        %v276 = vsub.s32 %v270, %v275
        %v277 = vsub.s32 0, %v276
        %v278 = vsel %vm268, %v277, %v276
        %vm279 = vcmp.ne.s32.totalorder %v267, 0
        %vm280 = vcmp.ne.s32.totalorder %v278, 0
        %vm281 = vcmp.lt.s32.totalorder %v267, 0
        %vm282 = vcmp.lt.s32.totalorder %v278, 0
        %vm283 = vmand %vm281, %vm279
        %vm284 = vmand %vm282, %vm280
        %v285 = vadd.s32 %v267, 17
        %v286 = vadd.s32 %v278, 17
        %v287 = vsel %vm283, %v285, %v267
        %v288 = vsel %vm284, %v286, %v278
        %vm289 = vcmp.eq.s32.totalorder %v287, 0
        %vm290 = vcmp.eq.s32.totalorder %v288, 0
        %v291 = vsel %vm289, 1, 0
        %v292 = vsel %vm290, 1, 0
        %v293 = vcvt.s32.f32 %v291
        %v294 = vcvt.s32.f32 %v292
        %v295 = vld [vmem:[#allocation2] sm:$0xff]
        %v296 = vld [vmem:[#allocation2 + $0x8] sm:$0xff]
        %v297 = vld [vmem:[#allocation2 + $0x10] sm:$0xff]
        %v298 = vld [vmem:[#allocation2 + $0x18] sm:$0xff]
        %v299 = vmul.f32 %v242, %v293
        %v300 = vmul.f32 %v243, %v294
        %v301 = vmul.f32 %v244, %v293
        %v302 = vmul.f32 %v245, %v294
        %v303 = vmul.f32 %v246, %v293
        %v304 = vmul.f32 %v247, %v294
        %v305 = vmul.f32 %v248, %v293
        %v306 = vmul.f32 %v249, %v294
        %v307 = vld [vmem:[%s2] sm:$0xff]
        %v308 = vld [vmem:[%s2 + $0x8] sm:$0xff]
        %v309 = vld [vmem:[%s2 + $0x10] sm:$0xff]
        %v310 = vld [vmem:[%s2 + $0x18] sm:$0xff]
        %312 = vset.pattern.permute.xlu0 0
        %313 = vperm.xlu0 %312, %v307
        %v314 = vpop.permute.xlu0 %313
        %317 = vset.pattern.permute.xlu0 0
        %318 = vperm.xlu0 %317, %v308
        %v319 = vpop.permute.xlu0 %318
        %322 = vset.pattern.permute.xlu0 0
        %323 = vperm.xlu0 %322, %v309
        %v324 = vpop.permute.xlu0 %323
        %327 = vset.pattern.permute.xlu0 0
        %328 = vperm.xlu0 %327, %v310
        %v329 = vpop.permute.xlu0 %328
        %vm331 = vcmask 523264
        %v333 = vsel %vm331, %v295, 0
        %v336 = vsel %vm331, %v296, 0
        %v339 = vsel %vm331, %v297, 0
        %v342 = vsel %vm331, %v298, 0
        %344 = vmatprep.subr.mxu0 0.0
        %345 = vmatpush1.msra.mxu0 0.0
        %346 = vmatprep.subr.mxu0 0.0
        %347 = vmatpush1.msra.mxu0 0.0
        %348 = vmatprep.subr.mxu0 0.0
        %349 = vmatpush1.msra.mxu0 0.0
        %350 = vmatprep.subr.mxu0 0.0
        %351 = vmatpush1.msra.mxu0 0.0
        %352 = vmatprep.subr.mxu0 0.0
        %353 = vmatpush1.msra.mxu0 0.0
        %354 = vmatprep.subr.mxu0 0.0
        %355 = vmatpush1.msra.mxu0 0.0
        %356 = vmatprep.subr.mxu0 0.0
        %357 = vmatpush1.msra.mxu0 0.0
        %358 = vmatprep.subr.mxu0 0.0
        %359 = vmatpush1.msra.mxu0 0.0
        %360 = vmatprep.subr.mxu0 %v306
        %361 = vmatpush1.msra.mxu0 %v305
        %362 = vmatprep.subr.mxu0 %v304
        %363 = vmatpush1.msra.mxu0 %v303
        %364 = vmatprep.subr.mxu0 %v302
        %365 = vmatpush1.msra.mxu0 %v301
        %366 = vmatprep.subr.mxu0 %v300
        %367 = vmatpush1.msra.mxu0 %v299
        %368 = vmatprep.subr.mxu0 %v249
        %369 = vmatpush1.msra.mxu0 %v248
        %370 = vmatprep.subr.mxu0 %v247
        %371 = vmatpush1.msra.mxu0 %v246
        %372 = vmatprep.subr.mxu0 %v245
        %373 = vmatpush1.msra.mxu0 %v244
        %374 = vmatprep.subr.mxu0 %v243
        %375 = vmatpush1.msra.mxu0 %v242
        %376 = vmatprep.subr.mxu0 0.0
        %377 = vmatpush2.msra.mxu0 0.0
        %378 = vmatprep.subr.mxu0 0.0
        %379 = vmatpush2.msra.mxu0 0.0
        %380 = vmatprep.subr.mxu0 0.0
        %381 = vmatpush2.msra.mxu0 0.0
        %382 = vmatprep.subr.mxu0 0.0
        %383 = vmatpush2.msra.mxu0 0.0
        %384 = vmatprep.subr.mxu0 0.0
        %385 = vmatpush2.msra.mxu0 0.0
        %386 = vmatprep.subr.mxu0 0.0
        %387 = vmatpush2.msra.mxu0 0.0
        %388 = vmatprep.subr.mxu0 0.0
        %389 = vmatpush2.msra.mxu0 0.0
        %390 = vmatprep.subr.mxu0 0.0
        %391 = vmatpush2.msra.mxu0 0.0
        %392 = vmatprep.subr.mxu0 0.0
        %393 = vmatpush2.msra.mxu0 0.0
        %394 = vmatprep.subr.mxu0 0.0
        %395 = vmatpush2.msra.mxu0 0.0
        %396 = vmatprep.subr.mxu0 0.0
        %397 = vmatpush2.msra.mxu0 0.0
        %398 = vmatprep.subr.mxu0 0.0
        %399 = vmatpush2.msra.mxu0 0.0
        %400 = vmatprep.subr.mxu0 0.0
        %401 = vmatpush2.msra.mxu0 0.0
        %402 = vmatprep.subr.mxu0 0.0
        %403 = vmatpush2.msra.mxu0 0.0
        %404 = vmatprep.subr.mxu0 0.0
        %405 = vmatpush2.msra.mxu0 0.0
        %406 = vmatprep.subr.mxu0 0.0
        %407 = vmatpush2.msra.mxu0 0.0
        %408 = vmatprep.mubr.f32.mxu0 0.0
        %409 = vmatmul.mubr.f32.gmra.mxu0 %v333
        %v410 = vpop.f32.mrf.mxu0
        %v411 = vadd.f32 %v314, %v410
        %v412 = vpop.f32.mrf.mxu0
        %v413 = vadd.f32 %v314, %v412
        %414 = vmatprep.mubr.f32.mxu0 0.0
        %415 = vmatmul.mubr.f32.gmra.mxu0 %v336
        %v416 = vpop.f32.mrf.mxu0
        %v417 = vadd.f32 %v319, %v416
        %v418 = vpop.f32.mrf.mxu0
        %v419 = vadd.f32 %v319, %v418
        %420 = vmatprep.mubr.f32.mxu0 0.0
        %421 = vmatmul.mubr.f32.gmra.mxu0 %v339
        %v422 = vpop.f32.mrf.mxu0
        %v423 = vadd.f32 %v324, %v422
        %v424 = vpop.f32.mrf.mxu0
        %v425 = vadd.f32 %v324, %v424
        %426 = vmatprep.mubr.f32.mxu0 0.0
        %427 = vmatmul.mubr.f32.gmra.mxu0 %v342
        %v428 = vpop.f32.mrf.mxu0
        %v429 = vadd.f32 %v329, %v428
        %v430 = vpop.f32.mrf.mxu0
        %v431 = vadd.f32 %v329, %v430
        %432 = vdwg.mxu0
        %v433 = vld [vmem:[%s3] sm:$0xff]
        %v434 = vld [vmem:[%s3 + $0x8] sm:$0xff]
        %v435 = vld [vmem:[%s3 + $0x10] sm:$0xff]
        %v436 = vld [vmem:[%s3 + $0x18] sm:$0xff]
        %438 = vset.pattern.permute.xlu0 0
        %439 = vperm.xlu0 %438, %v433
        %v440 = vpop.permute.xlu0 %439
        %443 = vset.pattern.permute.xlu0 0
        %444 = vperm.xlu0 %443, %v434
        %v445 = vpop.permute.xlu0 %444
        %448 = vset.pattern.permute.xlu0 0
        %449 = vperm.xlu0 %448, %v435
        %v450 = vpop.permute.xlu0 %449
        %453 = vset.pattern.permute.xlu0 0
        %454 = vperm.xlu0 %453, %v436
        %v455 = vpop.permute.xlu0 %454
        %v457 = vmul.f32 %v440, %v293
        %v458 = vmul.f32 %v440, %v294
        %v459 = vmul.f32 %v445, %v293
        %v460 = vmul.f32 %v445, %v294
        %v461 = vmul.f32 %v450, %v293
        %v462 = vmul.f32 %v450, %v294
        %v463 = vmul.f32 %v455, %v293
        %v464 = vmul.f32 %v455, %v294
        %v465 = vadd.f32 %v411, %v457
        %v466 = vadd.f32 %v413, %v458
        %v467 = vadd.f32 %v417, %v459
        %v468 = vadd.f32 %v419, %v460
        %v469 = vadd.f32 %v423, %v461
        %v470 = vadd.f32 %v425, %v462
        %v471 = vadd.f32 %v429, %v463
        %v472 = vadd.f32 %v431, %v464
        %v473 = vmax.f32 %v465, 0.0
        %v474 = vmax.f32 %v466, 0.0
        %v475 = vmax.f32 %v467, 0.0
        %v476 = vmax.f32 %v468, 0.0
        %v477 = vmax.f32 %v469, 0.0
        %v478 = vmax.f32 %v470, 0.0
        %v479 = vmax.f32 %v471, 0.0
        %v480 = vmax.f32 %v472, 0.0
        %s481 = scalar_lea.vmem [#allocation2], 32
        %v482 = vld [vmem:[%s481] sm:$0xff]
        %v483 = vld [vmem:[%s481 + $0x8] sm:$0xff]
        %v484 = vld [vmem:[%s481 + $0x10] sm:$0xff]
        %v485 = vld [vmem:[%s481 + $0x18] sm:$0xff]
        %v486 = vmul.f32 %v473, %v293
        %v487 = vmul.f32 %v474, %v294
        %v488 = vmul.f32 %v475, %v293
        %v489 = vmul.f32 %v476, %v294
        %v490 = vmul.f32 %v477, %v293
        %v491 = vmul.f32 %v478, %v294
        %v492 = vmul.f32 %v479, %v293
        %v493 = vmul.f32 %v480, %v294
        %s494 = scalar_lea.vmem %s2, 32
        %v495 = vld [vmem:[%s494] sm:$0xff]
        %v496 = vld [vmem:[%s494 + $0x8] sm:$0xff]
        %v497 = vld [vmem:[%s494 + $0x10] sm:$0xff]
        %v498 = vld [vmem:[%s494 + $0x18] sm:$0xff]
        %500 = vset.pattern.permute.xlu0 0
        %501 = vperm.xlu0 %500, %v495
        %v502 = vpop.permute.xlu0 %501
        %505 = vset.pattern.permute.xlu0 0
        %506 = vperm.xlu0 %505, %v496
        %v507 = vpop.permute.xlu0 %506
        %509 = vset.pattern.permute.xlu0 0
        %510 = vperm.xlu0 %509, %v497
        %v511 = vpop.permute.xlu0 %510
        %513 = vset.pattern.permute.xlu0 0
        %514 = vperm.xlu0 %513, %v498
        %v515 = vpop.permute.xlu0 %514
        %v517 = vsel %vm331, %v482, 0
        %v520 = vsel %vm331, %v483, 0
        %v523 = vsel %vm331, %v484, 0
        %v526 = vsel %vm331, %v485, 0
        %528 = vmatprep.subr.mxu0 0.0
        %529 = vmatpush1.msra.mxu0 0.0
        %530 = vmatprep.subr.mxu0 0.0
        %531 = vmatpush1.msra.mxu0 0.0
        %532 = vmatprep.subr.mxu0 0.0
        %533 = vmatpush1.msra.mxu0 0.0
        %534 = vmatprep.subr.mxu0 0.0
        %535 = vmatpush1.msra.mxu0 0.0
        %536 = vmatprep.subr.mxu0 0.0
        %537 = vmatpush1.msra.mxu0 0.0
        %538 = vmatprep.subr.mxu0 0.0
        %539 = vmatpush1.msra.mxu0 0.0
        %540 = vmatprep.subr.mxu0 0.0
        %541 = vmatpush1.msra.mxu0 0.0
        %542 = vmatprep.subr.mxu0 0.0
        %543 = vmatpush1.msra.mxu0 0.0
        %544 = vmatprep.subr.mxu0 %v493
        %545 = vmatpush1.msra.mxu0 %v492
        %546 = vmatprep.subr.mxu0 %v491
        %547 = vmatpush1.msra.mxu0 %v490
        %548 = vmatprep.subr.mxu0 %v489
        %549 = vmatpush1.msra.mxu0 %v488
        %550 = vmatprep.subr.mxu0 %v487
        %551 = vmatpush1.msra.mxu0 %v486
        %552 = vmatprep.subr.mxu0 %v480
        %553 = vmatpush1.msra.mxu0 %v479
        %554 = vmatprep.subr.mxu0 %v478
        %555 = vmatpush1.msra.mxu0 %v477
        %556 = vmatprep.subr.mxu0 %v476
        %557 = vmatpush1.msra.mxu0 %v475
        %558 = vmatprep.subr.mxu0 %v474
        %559 = vmatpush1.msra.mxu0 %v473
        %560 = vmatprep.subr.mxu0 0.0
        %561 = vmatpush2.msra.mxu0 0.0
        %562 = vmatprep.subr.mxu0 0.0
        %563 = vmatpush2.msra.mxu0 0.0
        %564 = vmatprep.subr.mxu0 0.0
        %565 = vmatpush2.msra.mxu0 0.0
        %566 = vmatprep.subr.mxu0 0.0
        %567 = vmatpush2.msra.mxu0 0.0
        %568 = vmatprep.subr.mxu0 0.0
        %569 = vmatpush2.msra.mxu0 0.0
        %570 = vmatprep.subr.mxu0 0.0
        %571 = vmatpush2.msra.mxu0 0.0
        %572 = vmatprep.subr.mxu0 0.0
        %573 = vmatpush2.msra.mxu0 0.0
        %574 = vmatprep.subr.mxu0 0.0
        %575 = vmatpush2.msra.mxu0 0.0
        %576 = vmatprep.subr.mxu0 0.0
        %577 = vmatpush2.msra.mxu0 0.0
        %578 = vmatprep.subr.mxu0 0.0
        %579 = vmatpush2.msra.mxu0 0.0
        %580 = vmatprep.subr.mxu0 0.0
        %581 = vmatpush2.msra.mxu0 0.0
        %582 = vmatprep.subr.mxu0 0.0
        %583 = vmatpush2.msra.mxu0 0.0
        %584 = vmatprep.subr.mxu0 0.0
        %585 = vmatpush2.msra.mxu0 0.0
        %586 = vmatprep.subr.mxu0 0.0
        %587 = vmatpush2.msra.mxu0 0.0
        %588 = vmatprep.subr.mxu0 0.0
        %589 = vmatpush2.msra.mxu0 0.0
        %590 = vmatprep.subr.mxu0 0.0
        %591 = vmatpush2.msra.mxu0 0.0
        %592 = vmatprep.mubr.f32.mxu0 0.0
        %593 = vmatmul.mubr.f32.gmra.mxu0 %v517
        %v594 = vpop.f32.mrf.mxu0
        %v595 = vadd.f32 %v502, %v594
        %v596 = vpop.f32.mrf.mxu0
        %v597 = vadd.f32 %v502, %v596
        %598 = vmatprep.mubr.f32.mxu0 0.0
        %599 = vmatmul.mubr.f32.gmra.mxu0 %v520
        %v600 = vpop.f32.mrf.mxu0
        %v601 = vpop.f32.mrf.mxu0
        %602 = vmatprep.mubr.f32.mxu0 0.0
        %603 = vmatmul.mubr.f32.gmra.mxu0 %v523
        %v604 = vpop.f32.mrf.mxu0
        %v605 = vpop.f32.mrf.mxu0
        %606 = vmatprep.mubr.f32.mxu0 0.0
        %607 = vmatmul.mubr.f32.gmra.mxu0 %v526
        %v608 = vpop.f32.mrf.mxu0
        %v609 = vpop.f32.mrf.mxu0
        %610 = vdwg.mxu0
        %s611 = scalar_lea.vmem %s3, 32
        %v612 = vld [vmem:[%s611] sm:$0xff]
        %614 = vset.pattern.permute.xlu0 0
        %615 = vperm.xlu0 %614, %v612
        %v616 = vpop.permute.xlu0 %615
        %v618 = vmul.f32 %v616, %v293
        %v619 = vmul.f32 %v616, %v294
        %v620 = vadd.f32 %v595, %v618
        %v621 = vadd.f32 %v597, %v619
        %622 = vst [vmem:[%s230] sm:$0xff] %v620
        %623 = vst [vmem:[%s230 + $0x8] sm:$0xff] %v621
        %s624 = sand.u32 %s132, 1
        %s625 = scalar_lea.sflag [#allocation4], %s624
        %s626 = sand.u32 %s132, 1
        %s627 = smul.addr %s626, 16
        %s628 = scalar_lea.vmem [#allocation5], %s627
        // Predicated region
        $region41: #{tpu_custom_call.1} parent=35 // pred_check
          %p629 = pneg %p142
        $region42: #{tpu_custom_call.1} parent=35 // pred_check_branch
          %631 = sbr.rel (%p629) target = $region44
        $region43: #{tpu_custom_call.1} parent=35 // pred_region
          %s632 = smul.u32 2, %s24
          %s634 = ssub.s32 256, 256
          %635 = vsyncadd %s625, %s634
          %s636 = smul.addr %s23, 2
          %s637 = sadd.s32 %s632, %s636
          %s638 = smul.addr %s637, 128
          %s639 = scalar_lea.hbm %s4, %s638
          %s641 = sshll.u32 %s628, 4
          %s642 = int_to_ptr.vmem [resolvable:$true] %s641
          %644 = dma.vmem_to_hbm [thread:$0]  %s642, 256, %s639, %s625
        $region44: #{tpu_custom_call.1} parent=35 // pred_fallthru
          _
      $region36: #{tpu_custom_call.1} parent=5 // pred_fallthru
        _
      %p645 = scmp.le.s32.totalorder 2, %s14
      // Predicated region
      $region45: #{tpu_custom_call.1} parent=5 // pred_check
        %p646 = pneg %p645
      $region46: #{tpu_custom_call.1} parent=5 // pred_check_branch
        %648 = sbr.rel (%p646) target = $region48
      $region47: #{tpu_custom_call.1} parent=5 // pred_region
        %s649 = ssub.s32 %s14, 2
        // Predicated region
        $region49: #{tpu_custom_call.1} parent=47 // pred_check
          %p650 = pneg %p148
        $region50: #{tpu_custom_call.1} parent=47 // pred_check_branch
          %652 = sbr.rel (%p650) target = $region52
        $region51: #{tpu_custom_call.1} parent=47 // pred_region
          %s653 = sand.u32 %s133, 1
          %s654 = scalar_lea.sflag [#allocation4], %s653
          %s655 = sand.u32 %s133, 1
          %s656 = smul.addr %s655, 16
          %s657 = scalar_lea.vmem [#allocation5], %s656
          %658 = dma.done %s654, 256
        $region52: #{tpu_custom_call.1} parent=47 // pred_fallthru
          _
      $region48: #{tpu_custom_call.1} parent=5 // pred_fallthru
        _
    $region6: #{tpu_custom_call.1} parent=1 // loop_footer
      %s18 = sadd.s32 1, %s14
    $region7: #{tpu_custom_call.1} parent=1 // loop_footer_branch
      %13 = sbr.rel target = $region3
    $region8: #{tpu_custom_call.1} parent=1 // loop_exit
      _
    %659 = vsyncpa [#allocation3], 1
    %s660 = scalar_lea.sflag [#allocation3], 1
    %661 = vsyncpa %s660, 1
    %662 = vsyncpa [#allocation4], 1
    %s663 = scalar_lea.sflag [#allocation4], 1
    %664 = vsyncpa %s663, 1

</llo_original>
